<compile_context>
chip_gen: v7x
topology: tpu7x:2x2x1
jax: 0.10.0
libtpu: 0.0.40
codegen_flags: <defaults>
</compile_context>

<pallas_src>
import jax
import jax.numpy as jnp
from jax.experimental import pallas as pl
from jax.experimental.pallas import tpu as pltpu


# ----------------------------------------------------------------------------
# Generation-aware sizing helpers
# ----------------------------------------------------------------------------
def _vmem_capacity_bytes():
    try:
        return int(pltpu.get_tpu_info().vmem_capacity_bytes)
    except Exception:
        return 64 * 1024 * 1024          # conservative fallback (v7x per-TC VMEM)


def _choose_tile_n(N, bytes_per_row, budget):
    """Largest row tile (multiple of 8, divides N) whose per-step footprint fits."""
    cands = [c for c in (2048, 1024, 512, 256, 128, 64, 32, 16, 8)
             if c <= N and N % c == 0]
    if not cands:
        return N                         # fall back to a single full-extent block
    for c in cands:
        if c * bytes_per_row <= budget:
            return c
    return cands[-1]


# ----------------------------------------------------------------------------
# Kernel 1: row-tiled pairwise squared distances  d[i, j] = ||x_i - x_j||^2
# ----------------------------------------------------------------------------
def _pdist_kernel(xr_ref, xa_ref, sqr_ref, sqc_ref, d_ref):
    xr = xr_ref[0]                        # [TN, F] bf16 (pre-cast in wrapper)
    xa = xa_ref[0]                        # [N,  F] bf16
    # NT matmul: contract the last dim of both operands -> no xa.T relayout.
    cross = jax.lax.dot_general(
        xr, xa, (((1,), (1,)), ((), ())),
        preferred_element_type=jnp.float32)            # [TN, N] on the MXU
    # Norms are precomputed (from the same bf16-rounded x, so d_ii ~ 0 exactly).
    d = sqr_ref[0] + sqc_ref[0] - 2.0 * cross           # [TN,1] + [1,N] broadcast
    # Clamp so cancellation can't produce negative distances, then store bf16
    # (halves the [B,N,N] HBM writeback and the top_k read; near-tie neighbour
    # ordering may be perturbed by ~1e-3 relative vs an f32 reference).
    d_ref[0] = jnp.maximum(d, 0.0).astype(d_ref.dtype)


def pairwise_sqdist(x_bf, sq_row, sq_col, tile_n, vmem_limit):
    B, N, F = x_bf.shape
    nt = N // tile_n
    return pl.pallas_call(
        _pdist_kernel,
        out_shape=jax.ShapeDtypeStruct((B, N, N), jnp.bfloat16),
        grid=(B, nt),
        in_specs=[
            pl.BlockSpec((1, tile_n, F), lambda b, t: (b, t, 0)),   # query row tile
            pl.BlockSpec((1, N, F), lambda b, t: (b, 0, 0)),        # full graph
            pl.BlockSpec((1, tile_n, 1), lambda b, t: (b, t, 0)),   # row norms
            pl.BlockSpec((1, 1, N), lambda b, t: (b, 0, 0)),        # column norms
        ],
        out_specs=pl.BlockSpec((1, tile_n, N), lambda b, t: (b, t, 0)),
        compiler_params=pltpu.CompilerParams(
            dimension_semantics=("parallel", "parallel"),
            vmem_limit_bytes=vmem_limit),
    )(x_bf, x_bf, sq_row, sq_col)


# ----------------------------------------------------------------------------
# Kernel 2: bilateral filter (dense-Wn MXU aggregation) + bias + activation + SSE
# ----------------------------------------------------------------------------
def _bilateral_kernel(sigma_ref, idx_ref, d2_ref, xlin_ref, y_ref, b_ref,
                      gen_ref, sse_ref):
    idx = idx_ref[0]                                  # [TN, K] int32 neighbour ids
    d2 = d2_ref[0].astype(jnp.float32)                # [TN, K] squared distances
    xlin = xlin_ref[0]                                # [N, F]  bf16 = x @ lin_w
    y = y_ref[0].astype(jnp.float32)                  # [TN, F] target rows
    bias = b_ref[...].astype(jnp.float32)             # [1, F]
    sigma = sigma_ref[0]                              # scalar (SMEM)

    tn, k = d2.shape
    n = xlin.shape[0]

    # Bilateral weights from the reused top_k distances (lane axis = K).
    inv2s2 = 0.5 / (sigma * sigma)
    bw = jnp.exp(-d2 * inv2s2)                                        # [TN, K] (EUP)
    denom = jnp.sum(bw, axis=-1, keepdims=True) + 1e-6                # self-weight ~1
    bw = bw * pl.reciprocal(denom, approx=True)                       # [TN, K]

    # Scatter the K normalized weights of each row into a dense [TN, N] matrix,
    # one K-column at a time.  K (=32) is static, so the loop is fully unrolled;
    # live intermediates are capped at ~[TN,N] (iota + wn) regardless of K.
    # top_k indices are distinct per row, so select-overwrite == accumulate.
    # Compares/selects stay f32 (v5e has no native bf16 VPU); only the dot is bf16.
    iota2d = jax.lax.broadcasted_iota(jnp.int32, (tn, n), 1)          # [TN, N]
    wn = jnp.zeros((tn, n), jnp.float32)
    for kk in range(k):
        wn = jnp.where(iota2d == idx[:, kk:kk + 1], bw[:, kk:kk + 1], wn)

    # Aggregation on the MXU; linear layer is already folded into xlin (x @ W).
    agg = jnp.dot(wn.astype(jnp.bfloat16), xlin,
                  preferred_element_type=jnp.float32)                 # [TN, F]
    # TODO(synk): AmaFilter(activation=True) activation type is not specified in the
    #             provided source; tanh is used here.
    out = jnp.tanh(agg + bias)

    gen_ref[0] = out.astype(gen_ref.dtype)

    # Per-(batch, row-tile) SSE -> fully parallel output, reduced outside the kernel.
    err = out - y
    sse_ref[0, 0, 0, 0] = jnp.sum(err * err)


def bilateral_filter(x_lin, idx, knn_d2, y, lin_b, sigma, tile_n, vmem_limit,
                     out_dtype):
    B, N, F = x_lin.shape
    K = idx.shape[2]
    nt = N // tile_n
    gen, sse = pl.pallas_call(
        _bilateral_kernel,
        out_shape=(
            jax.ShapeDtypeStruct((B, N, F), out_dtype),          # recon
            jax.ShapeDtypeStruct((B, nt, 1, 1), jnp.float32),    # per-tile SSE
        ),
        grid=(B, nt),
        in_specs=[
            pl.BlockSpec(memory_space=pltpu.MemorySpace.SMEM),        # sigma (scalar)
            pl.BlockSpec((1, tile_n, K), lambda b, t: (b, t, 0)),     # idx
            pl.BlockSpec((1, tile_n, K), lambda b, t: (b, t, 0)),     # knn_d2
            pl.BlockSpec((1, N, F), lambda b, t: (b, 0, 0)),          # x @ W (full)
            pl.BlockSpec((1, tile_n, F), lambda b, t: (b, t, 0)),     # y (target)
            pl.BlockSpec((1, F), lambda b, t: (0, 0)),                # linear bias
        ],
        out_specs=(
            pl.BlockSpec((1, tile_n, F), lambda b, t: (b, t, 0)),
            pl.BlockSpec((1, 1, 1, 1), lambda b, t: (b, t, 0, 0)),
        ),
        compiler_params=pltpu.CompilerParams(
            dimension_semantics=("parallel", "parallel"),
            vmem_limit_bytes=vmem_limit),
    )(sigma, idx, knn_d2, x_lin, y, lin_b)
    # TODO(synk): denominator counts all dense slots; ragged/padded PyG batches would
    #             need a valid-node count instead.
    mse = jnp.sum(sse) / jnp.float32(B * N * F)
    return gen, mse


# ----------------------------------------------------------------------------
# Module: AdversarialDenoiserv2
# ----------------------------------------------------------------------------
class AdversarialDenoiserV2:
    """JAX/Pallas port of AdversarialDenoiserv2 (denoiser = AmaFilter(fin, fin, k=32,
    filter=BilateralFilterv2, activation=True)).  __call__(x, y) -> (recon, recon_mse)."""

    def __init__(self, fin, k=32, key=jax.random.PRNGKey(42)):
        kw, _ = jax.random.split(key)
        # Deterministic synthetic parameter init (no checkpoint load).
        self.lin_w = (jax.random.normal(kw, (fin, fin), jnp.float32)
                      / jnp.sqrt(jnp.float32(fin)))
        self.lin_b = jnp.zeros((1, fin), jnp.float32)
        self.sigma = jnp.array([1.0], jnp.float32)   # bilateral bandwidth
        self.k = k

    def __call__(self, x, y, batch=None):
        # data.x -> x [B, N, F], data.y -> y [B, N, F]; data.batch is implicit in the
        # dense per-graph leading axis.
        B, N, F = x.shape
        assert self.k <= N and N % 8 == 0

        # Generation-aware tiling / scoped-VMEM limits (v5e/v6e: 128 MiB, v7x: 64 MiB).
        vmem_cap = _vmem_capacity_bytes()
        budget = int(0.35 * vmem_cap)
        vmem_limit = int(min(0.75 * vmem_cap, 100 * 2 ** 20))
        # kernel 1: driver is the double-buffered bf16 [tile, N] distance block.
        tile1 = _choose_tile_n(N, 4 * N + 64, budget)
        # kernel 2: driver is the in-kernel [tile, N] iota/wn live set (~10 B/elem).
        tile2 = _choose_tile_n(N, 10 * N + 24 * self.k + 256, budget)

        # Pre-cast x once; norms come from the same bf16-rounded values so the
        # self-distance on the diagonal is ~exactly 0.
        x_bf = x.astype(jnp.bfloat16)
        xb32 = x_bf.astype(jnp.float32)
        sq = jnp.sum(xb32 * xb32, axis=-1)            # [B, N]
        sq_row = sq[..., None]                        # [B, N, 1]
        sq_col = sq[:, None, :]                       # [B, 1, N]

        d = pairwise_sqdist(x_bf, sq_row, sq_col, tile1, vmem_limit)   # Pallas kernel 1
        # kNN selection: no clean Pallas top-k on TPU -> plain JAX glue.  The values
        # are REUSED as the bilateral distances (no recompute in kernel 2).
        neg_vals, idx = jax.lax.top_k(-d, self.k)     # [B, N, K] (includes self)
        knn_d2 = -neg_vals                            # [B, N, K], >= 0 (bf16)

        # Reassociated linear layer: (sum_k w_k x_{idx_k}) @ W == sum_k w_k (x @ W)_{idx_k}
        x_lin = (x.astype(jnp.float32) @ self.lin_w).astype(jnp.bfloat16)

        recon, recon_mse = bilateral_filter(          # Pallas kernel 2
            x_lin, idx, knn_d2, y, self.lin_b, self.sigma, tile2, vmem_limit,
            out_dtype=x.dtype)
        return recon, recon_mse


if __name__ == "__main__":
    B, N, F, K = 2, 128, 8, 32
    key = jax.random.PRNGKey(0)
    k_clean, k_noise = jax.random.split(key)
    clean = jax.random.normal(k_clean, (B, N, F), jnp.float32)
    noise = 0.1 * jax.random.normal(k_noise, (B, N, F), jnp.float32)

    x = clean + noise        # data.x : noisy point features
    y = clean                # data.y : clean target

    model = AdversarialDenoiserV2(fin=F, k=K)
    recon, recon_mse = model(x, y)
    jax.block_until_ready((recon, recon_mse))

    assert recon.shape == (B, N, F) and recon.dtype == x.dtype
    assert recon_mse.shape == () and jnp.isfinite(recon_mse)
    print("KERNEL_OK")
</pallas_src>

<mosaic_0001>
module attributes {stable_mosaic.version = 11 : i64} {
  func.func @_pdist_kernel(%arg0: i32, %arg1: i32, %arg2: memref<1x128x8xbf16, #tpu.memory_space<vmem>>, %arg3: memref<1x128x8xbf16, #tpu.memory_space<vmem>>, %arg4: memref<1x128x1xf32, #tpu.memory_space<vmem>>, %arg5: memref<1x1x128xf32, #tpu.memory_space<vmem>>, %arg6: memref<1x128x128xbf16, #tpu.memory_space<vmem>>) attributes {dimension_semantics = [#tpu.dimension_semantics<parallel>, #tpu.dimension_semantics<parallel>], iteration_bounds = array<i64: 2, 1>, scalar_prefetch = 0 : i64, scratch_operands = 0 : i64, tpu.core_type = #tpu.core_type<tc>, window_params = [{transform_indices = @transform_0, window_bounds = array<i64: 1, 128, 8>}, {transform_indices = @transform_1, window_bounds = array<i64: 1, 128, 8>}, {transform_indices = @transform_2, window_bounds = array<i64: 1, 128, 1>}, {transform_indices = @transform_3, window_bounds = array<i64: 1, 1, 128>}, {transform_indices = @transform_4, window_bounds = array<i64: 1, 128, 128>}]} {
    %c0 = arith.constant 0 : index
    %c0_0 = arith.constant 0 : index
    %c0_1 = arith.constant 0 : index
    %0 = vector.load %arg2[%c0, %c0_0, %c0_1] : memref<1x128x8xbf16, #tpu.memory_space<vmem>>, vector<1x128x8xbf16>
    %1 = vector.shape_cast %0 : vector<1x128x8xbf16> to vector<128x8xbf16>
    %c0_2 = arith.constant 0 : index
    %c0_3 = arith.constant 0 : index
    %c0_4 = arith.constant 0 : index
    %2 = vector.load %arg3[%c0_2, %c0_3, %c0_4] : memref<1x128x8xbf16, #tpu.memory_space<vmem>>, vector<1x128x8xbf16>
    %3 = vector.shape_cast %2 : vector<1x128x8xbf16> to vector<128x8xbf16>
    %cst = arith.constant dense<0.000000e+00> : vector<128x128xf32>
    %4 = tpu.matmul %1, %3, %cst {dimension_numbers = #tpu.dot_dimension_numbers<[1], [1], [0], [0], [0, 0, 1, 0], [], []>} : vector<128x8xbf16>, vector<128x8xbf16>, vector<128x128xf32> -> vector<128x128xf32>
    %c0_5 = arith.constant 0 : index
    %c0_6 = arith.constant 0 : index
    %c0_7 = arith.constant 0 : index
    %5 = vector.load %arg4[%c0_5, %c0_6, %c0_7] : memref<1x128x1xf32, #tpu.memory_space<vmem>>, vector<1x128x1xf32>
    %6 = vector.shape_cast %5 : vector<1x128x1xf32> to vector<128x1xf32>
    %c0_8 = arith.constant 0 : index
    %c0_9 = arith.constant 0 : index
    %c0_10 = arith.constant 0 : index
    %7 = vector.load %arg5[%c0_8, %c0_9, %c0_10] : memref<1x1x128xf32, #tpu.memory_space<vmem>>, vector<1x1x128xf32>
    %8 = vector.shape_cast %7 : vector<1x1x128xf32> to vector<1x128xf32>
    %9 = vector.broadcast %6 : vector<128x1xf32> to vector<128x128xf32>
    %10 = vector.broadcast %8 : vector<1x128xf32> to vector<128x128xf32>
    %11 = arith.addf %9, %10 : vector<128x128xf32>
    %cst_11 = arith.constant 2.000000e+00 : f32
    %12 = vector.broadcast %cst_11 : f32 to vector<128x128xf32>
    %13 = arith.mulf %12, %4 : vector<128x128xf32>
    %14 = arith.subf %11, %13 : vector<128x128xf32>
    %cst_12 = arith.constant 0.000000e+00 : f32
    %15 = vector.broadcast %cst_12 : f32 to vector<128x128xf32>
    %16 = arith.maximumf %14, %15 : vector<128x128xf32>
    %17 = arith.truncf %16 : vector<128x128xf32> to vector<128x128xbf16>
    %c0_13 = arith.constant 0 : index
    %c0_14 = arith.constant 0 : index
    %c0_15 = arith.constant 0 : index
    %18 = vector.load %arg6[%c0_13, %c0_14, %c0_15] : memref<1x128x128xbf16, #tpu.memory_space<vmem>>, vector<1x128x128xbf16>
    %19 = vector.shape_cast %18 : vector<1x128x128xbf16> to vector<128x128xbf16>
    %20 = vector.shape_cast %17 : vector<128x128xbf16> to vector<1x128x128xbf16>
    tpu.vector_store %arg6[%c0_13, %c0_14, %c0_15], %20 {strides = array<i32>} : memref<1x128x128xbf16, #tpu.memory_space<vmem>>, vector<1x128x128xbf16>,
    return
  }
  func.func @transform_0(%arg0: i32, %arg1: i32) -> (i32, i32, i32) {
    %c0_i32 = arith.constant 0 : i32
    %c0_i32_0 = arith.constant 0 : i32
    return %arg0, %arg1, %c0_i32 : i32, i32, i32
  }
  func.func @transform_1(%arg0: i32, %arg1: i32) -> (i32, i32, i32) {
    %c0_i32 = arith.constant 0 : i32
    %c0_i32_0 = arith.constant 0 : i32
    %c0_i32_1 = arith.constant 0 : i32
    return %arg0, %c0_i32, %c0_i32_0 : i32, i32, i32
  }
  func.func @transform_2(%arg0: i32, %arg1: i32) -> (i32, i32, i32) {
    %c0_i32 = arith.constant 0 : i32
    %c0_i32_0 = arith.constant 0 : i32
    return %arg0, %arg1, %c0_i32 : i32, i32, i32
  }
  func.func @transform_3(%arg0: i32, %arg1: i32) -> (i32, i32, i32) {
    %c0_i32 = arith.constant 0 : i32
    %c0_i32_0 = arith.constant 0 : i32
    %c0_i32_1 = arith.constant 0 : i32
    return %arg0, %c0_i32, %c0_i32_0 : i32, i32, i32
  }
  func.func @transform_4(%arg0: i32, %arg1: i32) -> (i32, i32, i32) {
    %c0_i32 = arith.constant 0 : i32
    %c0_i32_0 = arith.constant 0 : i32
    return %arg0, %arg1, %c0_i32 : i32, i32, i32
  }
}

</mosaic_0001>

<llo_original>
// kernel: tpu_custom_call.1
$region0: #{tpu_custom_call.1}
  #allocation0 [shape = 'u32[]', space=smem, size = 0x4, offset = 0x4, fixed_abs, tag = 'smem constant byte address 0x4 - core index']
  #allocation1 [shape = 'u32[144,128]{1,0:T(1,128)}', space=vmem, size = 0x12000, scoped, tag = 'internal scratch']
  %s0 = inlined_call_operand.vmem [shape: bf16[2,128,8], index: 0, kind: input, shape index: {}]
  %s1 = inlined_call_operand.vmem [shape: bf16[2,128,8], index: 1, kind: input, shape index: {}]
  %s2 = inlined_call_operand.vmem [shape: f32[2,128,1], index: 2, kind: input, shape index: {}]
  %s3 = inlined_call_operand.vmem [shape: f32[2,1,128], index: 3, kind: input, shape index: {}]
  %s4 = inlined_call_operand.hbm [shape: bf16[2,128,128], index: 4, kind: output, shape index: {}]
  %s5 = sld [smem:[#allocation0]]
  $region49: #{tpu_custom_call.1} parent=0
    _
  %s7 = ssub.s32 1, %s5
  %s8 = scalar_select 0, %s7, %s5
  $region1: #{tpu_custom_call.1} parent=0
    #allocation2 [shape = 'u8[65536]{0}', space=vmem, size = 0x10000, scoped, tag = 'output window, operand 0']
    #allocation3 [shape = 's32[2]{0}', space=sflag, size = 0x8, scoped, tag = 'scoped memory for tpu_custom_call.1']
    %9 = vsyncpa [#allocation3], 0
    %s10 = scalar_lea.sflag [#allocation3], 1
    %11 = vsyncpa %s10, 0
    loop: start=0, step=1, limit=4
    $region2: #{tpu_custom_call.1} parent=1 // loop_pre_header
      _
    $region3: #{tpu_custom_call.1} parent=1 // loop_header
      %s13 = sphi 0, %s17
      %p14 = scmp.ge.s32.totalorder %s13, 4
      %s20 = sphi 0, %s32
      %s21 = sphi 0, %s28
      %s22 = sphi 0, %s20
      %s23 = sphi 0, %s21
      %s24 = sphi 0, %s22
      %s25 = sphi 0, %s23
      %s37 = sphi 0, %s39
      %s40 = sphi 0, %s37
      %s41 = sphi 0, %s40
      %s57 = sphi 0, %s41
      %s63 = sphi 0, %s65
      %s66 = sphi 0, %s63
      %s67 = sphi 0, %s66
      %s83 = sphi 0, %s67
      %s91 = sphi 0, %s93
      %s94 = sphi 0, %s91
      %s95 = sphi 0, %s94
      %s111 = sphi 0, %s95
      %s117 = sphi 0, %s119
      %s120 = sphi 0, %s117
      %s121 = sphi 0, %s120
      %s137 = sphi 0, %s121
      %s145 = sphi 0, %s147
      %s148 = sphi 0, %s145
      %s149 = sphi 0, %s148
      %s165 = sphi 0, %s149
    $region4: #{tpu_custom_call.1} parent=1 // loop_header_branch
      %16 = sbr.rel (%p14) target = $region8
    $region5: #{tpu_custom_call.1} parent=1 // loop_body
      %s18 = ssub.s32 %s13, 1
      %s19 = ssub.s32 %s13, 2
      %s26 = sadd.s32 1, %s21
      %p27 = scmp.ge.s32.totalorder %s26, 1
      %s28 = scalar_select %p27, 0, %s26
      %s29 = sadd.s32 1, %s20
      %s30 = scalar_select %p27, %s29, %s20
      %p31 = scmp.ge.s32.totalorder %s30, 2
      %s32 = scalar_select %p31, 0, %s30
      %s33 = ssub.s32 %s20, %s32
      %s34 = ssub.s32 %s21, %s28
      %s35 = sor.u32 %s33, %s34
      %p36 = scmp.eq.s32.totalorder %s35, 0
      %s38 = sadd.s32 %s37, 1
      %s39 = scalar_select %p36, %s37, %s38
      %p42 = pneg %p36
      %p43 = scmp.eq.s32.totalorder %s13, 1
      %p44 = por %p42, %p43
      %p45 = scmp.ne.s32.totalorder %s37, %s40
      %p46 = scmp.eq.s32.totalorder %s13, 0
      %p47 = por %p45, %p46
      %p48 = scmp.ne.s32.totalorder %s37, %s40
      %p49 = scmp.eq.s32.totalorder %s18, 1
      %p50 = por %p48, %p49
      %p51 = scmp.ne.s32.totalorder %s40, %s41
      %p52 = scmp.eq.s32.totalorder %s18, 0
      %p53 = por %p51, %p52
      %p54 = scmp.ne.s32.totalorder %s40, %s41
      %p55 = scmp.eq.s32.totalorder %s19, 1
      %p56 = por %p54, %p55
      %p58 = scmp.ne.s32.totalorder %s41, %s57
      %p59 = scmp.eq.s32.totalorder %s19, 0
      %p60 = por %p58, %p59
      %s61 = ssub.s32 %s20, %s32
      %p62 = scmp.eq.s32.totalorder %s61, 0
      %s64 = sadd.s32 %s63, 1
      %s65 = scalar_select %p62, %s63, %s64
      %p68 = pneg %p62
      %p69 = scmp.eq.s32.totalorder %s13, 1
      %p70 = por %p68, %p69
      %p71 = scmp.ne.s32.totalorder %s63, %s66
      %p72 = scmp.eq.s32.totalorder %s13, 0
      %p73 = por %p71, %p72
      %p74 = scmp.ne.s32.totalorder %s63, %s66
      %p75 = scmp.eq.s32.totalorder %s18, 1
      %p76 = por %p74, %p75
      %p77 = scmp.ne.s32.totalorder %s66, %s67
      %p78 = scmp.eq.s32.totalorder %s18, 0
      %p79 = por %p77, %p78
      %p80 = scmp.ne.s32.totalorder %s66, %s67
      %p81 = scmp.eq.s32.totalorder %s19, 1
      %p82 = por %p80, %p81
      %p84 = scmp.ne.s32.totalorder %s67, %s83
      %p85 = scmp.eq.s32.totalorder %s19, 0
      %p86 = por %p84, %p85
      %s87 = ssub.s32 %s20, %s32
      %s88 = ssub.s32 %s21, %s28
      %s89 = sor.u32 %s87, %s88
      %p90 = scmp.eq.s32.totalorder %s89, 0
      %s92 = sadd.s32 %s91, 1
      %s93 = scalar_select %p90, %s91, %s92
      %p96 = pneg %p90
      %p97 = scmp.eq.s32.totalorder %s13, 1
      %p98 = por %p96, %p97
      %p99 = scmp.ne.s32.totalorder %s91, %s94
      %p100 = scmp.eq.s32.totalorder %s13, 0
      %p101 = por %p99, %p100
      %p102 = scmp.ne.s32.totalorder %s91, %s94
      %p103 = scmp.eq.s32.totalorder %s18, 1
      %p104 = por %p102, %p103
      %p105 = scmp.ne.s32.totalorder %s94, %s95
      %p106 = scmp.eq.s32.totalorder %s18, 0
      %p107 = por %p105, %p106
      %p108 = scmp.ne.s32.totalorder %s94, %s95
      %p109 = scmp.eq.s32.totalorder %s19, 1
      %p110 = por %p108, %p109
      %p112 = scmp.ne.s32.totalorder %s95, %s111
      %p113 = scmp.eq.s32.totalorder %s19, 0
      %p114 = por %p112, %p113
      %s115 = ssub.s32 %s20, %s32
      %p116 = scmp.eq.s32.totalorder %s115, 0
      %s118 = sadd.s32 %s117, 1
      %s119 = scalar_select %p116, %s117, %s118
      %p122 = pneg %p116
      %p123 = scmp.eq.s32.totalorder %s13, 1
      %p124 = por %p122, %p123
      %p125 = scmp.ne.s32.totalorder %s117, %s120
      %p126 = scmp.eq.s32.totalorder %s13, 0
      %p127 = por %p125, %p126
      %p128 = scmp.ne.s32.totalorder %s117, %s120
      %p129 = scmp.eq.s32.totalorder %s18, 1
      %p130 = por %p128, %p129
      %p131 = scmp.ne.s32.totalorder %s120, %s121
      %p132 = scmp.eq.s32.totalorder %s18, 0
      %p133 = por %p131, %p132
      %p134 = scmp.ne.s32.totalorder %s120, %s121
      %p135 = scmp.eq.s32.totalorder %s19, 1
      %p136 = por %p134, %p135
      %p138 = scmp.ne.s32.totalorder %s121, %s137
      %p139 = scmp.eq.s32.totalorder %s19, 0
      %p140 = por %p138, %p139
      %s141 = ssub.s32 %s20, %s32
      %s142 = ssub.s32 %s21, %s28
      %s143 = sor.u32 %s141, %s142
      %p144 = scmp.eq.s32.totalorder %s143, 0
      %s146 = sadd.s32 %s145, 1
      %s147 = scalar_select %p144, %s145, %s146
      %p150 = pneg %p144
      %p151 = scmp.eq.s32.totalorder %s13, 1
      %p152 = por %p150, %p151
      %p153 = scmp.ne.s32.totalorder %s145, %s148
      %p154 = scmp.eq.s32.totalorder %s13, 0
      %p155 = por %p153, %p154
      %p156 = scmp.ne.s32.totalorder %s145, %s148
      %p157 = scmp.eq.s32.totalorder %s18, 1
      %p158 = por %p156, %p157
      %p159 = scmp.ne.s32.totalorder %s148, %s149
      %p160 = scmp.eq.s32.totalorder %s18, 0
      %p161 = por %p159, %p160
      %p162 = scmp.ne.s32.totalorder %s148, %s149
      %p163 = scmp.eq.s32.totalorder %s19, 1
      %p164 = por %p162, %p163
      %p166 = scmp.ne.s32.totalorder %s149, %s165
      %p167 = scmp.eq.s32.totalorder %s19, 0
      %p168 = por %p166, %p167
      %p169 = scmp.le.s32.totalorder 1, %s13
      %p170 = scmp.lt.s32.totalorder %s13, 3
      %p171 = pnand %p169, %p170
      %p172 = pneg %p171
      // Predicated region
      $region9: #{tpu_custom_call.1} parent=5 // pred_check
        _
      $region10: #{tpu_custom_call.1} parent=5 // pred_check_branch
        %174 = sbr.rel (%p171) target = $region12
      $region11: #{tpu_custom_call.1} parent=5 // pred_region
        %s175 = ssub.s32 %s13, 1
      $region12: #{tpu_custom_call.1} parent=5 // pred_fallthru
        _
      %p176 = scmp.lt.s32.totalorder %s13, 2
      // Predicated region
      $region13: #{tpu_custom_call.1} parent=5 // pred_check
        %p177 = pneg %p176
      $region14: #{tpu_custom_call.1} parent=5 // pred_check_branch
        %179 = sbr.rel (%p177) target = $region16
      $region15: #{tpu_custom_call.1} parent=5 // pred_region
        // Predicated region
        $region17: #{tpu_custom_call.1} parent=15 // pred_check
          %p180 = pneg %p47
        $region18: #{tpu_custom_call.1} parent=15 // pred_check_branch
          %182 = sbr.rel (%p180) target = $region20
        $region19: #{tpu_custom_call.1} parent=15 // pred_region
          %s183 = smul.u32 16, %s21
          %p184 = scmp.lt.s32.totalorder %s20, 1
          %s185 = scalar_select %p184, %s20, 1
          %p186 = scmp.lt.s32.totalorder %s183, 15
          %s187 = scalar_select %p186, %s183, 15
          %s188 = smul.addr %s185, 16
          %s189 = sadd.s32 %s187, %s188
          %s190 = smul.addr %s189, 4
          %s191 = scalar_lea.vmem %s0, %s190
          %s192 = smul.u32 16, %s21
        $region20: #{tpu_custom_call.1} parent=15 // pred_fallthru
          _
        // Predicated region
        $region21: #{tpu_custom_call.1} parent=15 // pred_check
          %p193 = pneg %p73
        $region22: #{tpu_custom_call.1} parent=15 // pred_check_branch
          %195 = sbr.rel (%p193) target = $region24
        $region23: #{tpu_custom_call.1} parent=15 // pred_region
          %p196 = scmp.lt.s32.totalorder %s20, 1
          %s197 = scalar_select %p196, %s20, 1
          %s198 = smul.addr %s197, 16
          %s199 = smul.addr %s198, 4
          %s200 = scalar_lea.vmem %s1, %s199
        $region24: #{tpu_custom_call.1} parent=15 // pred_fallthru
          _
        // Predicated region
        $region25: #{tpu_custom_call.1} parent=15 // pred_check
          %p201 = pneg %p101
        $region26: #{tpu_custom_call.1} parent=15 // pred_check_branch
          %203 = sbr.rel (%p201) target = $region28
        $region27: #{tpu_custom_call.1} parent=15 // pred_region
          %s204 = smul.u32 16, %s21
          %p205 = scmp.lt.s32.totalorder %s20, 1
          %s206 = scalar_select %p205, %s20, 1
          %p207 = scmp.lt.s32.totalorder %s204, 15
          %s208 = scalar_select %p207, %s204, 15
          %s209 = smul.addr %s206, 16
          %s210 = sadd.s32 %s208, %s209
          %s211 = smul.addr %s210, 8
          %s212 = scalar_lea.vmem %s2, %s211
          %s213 = smul.u32 16, %s21
        $region28: #{tpu_custom_call.1} parent=15 // pred_fallthru
          _
        // Predicated region
        $region29: #{tpu_custom_call.1} parent=15 // pred_check
          %p214 = pneg %p127
        $region30: #{tpu_custom_call.1} parent=15 // pred_check_branch
          %216 = sbr.rel (%p214) target = $region32
        $region31: #{tpu_custom_call.1} parent=15 // pred_region
          %p217 = scmp.lt.s32.totalorder %s20, 1
          %s218 = scalar_select %p217, %s20, 1
          %s219 = scalar_lea.vmem %s3, %s218
        $region32: #{tpu_custom_call.1} parent=15 // pred_fallthru
          _
      $region16: #{tpu_custom_call.1} parent=5 // pred_fallthru
        _
      %p220 = scmp.le.s32.totalorder 1, %s13
      %p221 = scmp.lt.s32.totalorder %s13, 3
      %p222 = pnand %p220, %p221
      %p223 = pneg %p222
      // Predicated region
      $region33: #{tpu_custom_call.1} parent=5 // pred_check
        _
      $region34: #{tpu_custom_call.1} parent=5 // pred_check_branch
        %225 = sbr.rel (%p222) target = $region36
      $region35: #{tpu_custom_call.1} parent=5 // pred_region
        %s226 = ssub.s32 %s13, 1
        %s227 = smul.u32 16, %s23
        %p228 = scmp.lt.s32.totalorder %s22, 1
        %s229 = scalar_select %p228, %s22, 1
        %p230 = scmp.lt.s32.totalorder %s227, 15
        %s231 = scalar_select %p230, %s227, 15
        %s232 = smul.addr %s229, 16
        %s233 = sadd.s32 %s231, %s232
        %s234 = smul.addr %s233, 4
        %s235 = scalar_lea.vmem %s0, %s234
        %p236 = pneg %p53
        %p237 = pneg %p50
        %p238 = scmp.lt.s32.totalorder %s22, 1
        %s239 = scalar_select %p238, %s22, 1
        %s240 = smul.addr %s239, 16
        %s241 = smul.addr %s240, 4
        %s242 = scalar_lea.vmem %s1, %s241
        %p243 = pneg %p79
        %p244 = pneg %p76
        %s245 = smul.u32 16, %s23
        %p246 = scmp.lt.s32.totalorder %s22, 1
        %s247 = scalar_select %p246, %s22, 1
        %p248 = scmp.lt.s32.totalorder %s245, 15
        %s249 = scalar_select %p248, %s245, 15
        %s250 = smul.addr %s247, 16
        %s251 = sadd.s32 %s249, %s250
        %s252 = smul.addr %s251, 8
        %s253 = scalar_lea.vmem %s2, %s252
        %p254 = pneg %p107
        %p255 = pneg %p104
        %p256 = scmp.lt.s32.totalorder %s22, 1
        %s257 = scalar_select %p256, %s22, 1
        %s258 = scalar_lea.vmem %s3, %s257
        %p259 = pneg %p133
        %p260 = pneg %p130
        %p261 = pneg %p161
        %p262 = pneg %p158
        %s263 = sand.u32 %s148, 1
        %s264 = scalar_lea.sflag [#allocation3], %s263
        %s265 = sand.u32 %s148, 1
        %s266 = smul.addr %s265, 64
        %s267 = scalar_lea.vmem [#allocation2], %s266
        %s268 = smul.u32 16, %s23
        %p269 = scmp.lt.s32.totalorder %s22, 1
        %s270 = scalar_select %p269, %s22, 1
        %p271 = scmp.lt.s32.totalorder %s268, 15
        %s272 = scalar_select %p271, %s268, 15
        %s273 = smul.addr %s270, 16
        %s274 = sadd.s32 %s272, %s273
        %s275 = smul.addr %s274, 4
        %s276 = scalar_lea.vmem %s0, %s275
        %s277 = smul.u32 16, %s23
        %p278 = scmp.lt.s32.totalorder %s22, 1
        %s279 = scalar_select %p278, %s22, 1
        %s280 = smul.addr %s279, 16
        %s281 = smul.addr %s280, 4
        %s282 = scalar_lea.vmem %s1, %s281
        %s283 = smul.u32 16, %s23
        %p284 = scmp.lt.s32.totalorder %s22, 1
        %s285 = scalar_select %p284, %s22, 1
        %p286 = scmp.lt.s32.totalorder %s283, 15
        %s287 = scalar_select %p286, %s283, 15
        %s288 = smul.addr %s285, 16
        %s289 = sadd.s32 %s287, %s288
        %s290 = smul.addr %s289, 8
        %s291 = scalar_lea.vmem %s2, %s290
        %s292 = smul.u32 16, %s23
        %p293 = scmp.lt.s32.totalorder %s22, 1
        %s294 = scalar_select %p293, %s22, 1
        %s295 = scalar_lea.vmem %s3, %s294
        %s296 = smul.u32 16, %s23
        %v298 = vld [vmem:[%s276] sm:$0xf]
        %v299 = vld [vmem:[%s276 + $0x4] sm:$0xf]
        %v300 = vld [vmem:[%s276 + $0x8] sm:$0xf]
        %v301 = vld [vmem:[%s276 + $0xc] sm:$0xf]
        %v302 = vld [vmem:[%s276 + $0x10] sm:$0xf]
        %v303 = vld [vmem:[%s276 + $0x14] sm:$0xf]
        %v304 = vld [vmem:[%s276 + $0x18] sm:$0xf]
        %v305 = vld [vmem:[%s276 + $0x1c] sm:$0xf]
        %v306 = vld [vmem:[%s276 + $0x20] sm:$0xf]
        %v307 = vld [vmem:[%s276 + $0x24] sm:$0xf]
        %v308 = vld [vmem:[%s276 + $0x28] sm:$0xf]
        %v309 = vld [vmem:[%s276 + $0x2c] sm:$0xf]
        %v310 = vld [vmem:[%s276 + $0x30] sm:$0xf]
        %v311 = vld [vmem:[%s276 + $0x34] sm:$0xf]
        %v312 = vld [vmem:[%s276 + $0x38] sm:$0xf]
        %v313 = vld [vmem:[%s276 + $0x3c] sm:$0xf]
        %v314 = vld [vmem:[%s282] sm:$0xf]
        %v315 = vld [vmem:[%s282 + $0x4] sm:$0xf]
        %v316 = vld [vmem:[%s282 + $0x8] sm:$0xf]
        %v317 = vld [vmem:[%s282 + $0xc] sm:$0xf]
        %v318 = vld [vmem:[%s282 + $0x10] sm:$0xf]
        %v319 = vld [vmem:[%s282 + $0x14] sm:$0xf]
        %v320 = vld [vmem:[%s282 + $0x18] sm:$0xf]
        %v321 = vld [vmem:[%s282 + $0x1c] sm:$0xf]
        %v322 = vld [vmem:[%s282 + $0x20] sm:$0xf]
        %v323 = vld [vmem:[%s282 + $0x24] sm:$0xf]
        %v324 = vld [vmem:[%s282 + $0x28] sm:$0xf]
        %v325 = vld [vmem:[%s282 + $0x2c] sm:$0xf]
        %v326 = vld [vmem:[%s282 + $0x30] sm:$0xf]
        %v327 = vld [vmem:[%s282 + $0x34] sm:$0xf]
        %v328 = vld [vmem:[%s282 + $0x38] sm:$0xf]
        %v329 = vld [vmem:[%s282 + $0x3c] sm:$0xf]
        %v346 = vunpack.c.l.b16 %v298
        %v347 = vunpack.c.l.b16 %v299
        %v348 = vunpack.c.l.b16 %v300
        %v349 = vunpack.c.l.b16 %v301
        %v350 = vunpack.c.l.b16 %v302
        %v351 = vunpack.c.l.b16 %v303
        %v352 = vunpack.c.l.b16 %v304
        %v353 = vunpack.c.l.b16 %v305
        %v354 = vunpack.c.l.b16 %v306
        %v355 = vunpack.c.l.b16 %v307
        %v356 = vunpack.c.l.b16 %v308
        %v357 = vunpack.c.l.b16 %v309
        %v358 = vunpack.c.l.b16 %v310
        %v359 = vunpack.c.l.b16 %v311
        %v360 = vunpack.c.l.b16 %v312
        %v361 = vunpack.c.l.b16 %v313
        %v362 = vpack.c.b16 %v347, %v346
        %v363 = vpack.c.b16 %v349, %v348
        %v364 = vpack.c.b16 %v351, %v350
        %v365 = vpack.c.b16 %v353, %v352
        %v366 = vpack.c.b16 %v355, %v354
        %v367 = vpack.c.b16 %v357, %v356
        %v368 = vpack.c.b16 %v359, %v358
        %v369 = vpack.c.b16 %v361, %v360
        %v386 = vunpack.c.l.b16 %v314
        %v387 = vunpack.c.l.b16 %v315
        %v388 = vunpack.c.l.b16 %v316
        %v389 = vunpack.c.l.b16 %v317
        %v390 = vunpack.c.l.b16 %v318
        %v391 = vunpack.c.l.b16 %v319
        %v392 = vunpack.c.l.b16 %v320
        %v393 = vunpack.c.l.b16 %v321
        %v394 = vunpack.c.l.b16 %v322
        %v395 = vunpack.c.l.b16 %v323
        %v396 = vunpack.c.l.b16 %v324
        %v397 = vunpack.c.l.b16 %v325
        %v398 = vunpack.c.l.b16 %v326
        %v399 = vunpack.c.l.b16 %v327
        %v400 = vunpack.c.l.b16 %v328
        %v401 = vunpack.c.l.b16 %v329
        %v402 = vpack.c.b16 %v387, %v386
        %v403 = vpack.c.b16 %v389, %v388
        %v404 = vpack.c.b16 %v391, %v390
        %v405 = vpack.c.b16 %v393, %v392
        %v406 = vpack.c.b16 %v395, %v394
        %v407 = vpack.c.b16 %v397, %v396
        %v408 = vpack.c.b16 %v399, %v398
        %v409 = vpack.c.b16 %v401, %v400
        %vm410 = vcmask 64512
        %v412 = vsel %vm410, %v362, 0
        %v415 = vsel %vm410, %v363, 0
        %v418 = vsel %vm410, %v364, 0
        %v421 = vsel %vm410, %v365, 0
        %v424 = vsel %vm410, %v366, 0
        %v427 = vsel %vm410, %v367, 0
        %v430 = vsel %vm410, %v368, 0
        %v433 = vsel %vm410, %v369, 0
        %v436 = vsel %vm410, %v402, 0
        %v439 = vsel %vm410, %v403, 0
        %v442 = vsel %vm410, %v404, 0
        %v445 = vsel %vm410, %v405, 0
        %v448 = vsel %vm410, %v406, 0
        %v451 = vsel %vm410, %v407, 0
        %v454 = vsel %vm410, %v408, 0
        %v457 = vsel %vm410, %v409, 0
        %459 = vmatprep.subr.bf16.mxu0 0
        %460 = vmatpush1.bf16.xpose.msra.mxu0 %v436
        %461 = vmatprep.subr.bf16.mxu0 0
        %462 = vmatpush1.bf16.xpose.msra.mxu0 %v439
        %463 = vmatprep.subr.bf16.mxu0 0
        %464 = vmatpush1.bf16.xpose.msra.mxu0 %v442
        %465 = vmatprep.subr.bf16.mxu0 0
        %466 = vmatpush1.bf16.xpose.msra.mxu0 %v445
        %467 = vmatprep.subr.bf16.mxu0 0
        %468 = vmatpush1.bf16.xpose.msra.mxu0 %v448
        %469 = vmatprep.subr.bf16.mxu0 0
        %470 = vmatpush1.bf16.xpose.msra.mxu0 %v451
        %471 = vmatprep.subr.bf16.mxu0 0
        %472 = vmatpush1.bf16.xpose.msra.mxu0 %v454
        %473 = vmatprep.subr.bf16.mxu0 0
        %474 = vmatpush1.bf16.xpose.msra.mxu0 %v457
        %475 = vmatprep.subr.bf16.mxu0 0
        %476 = vmatpush1.bf16.xpose.msra.mxu0 0
        %477 = vmatprep.subr.bf16.mxu0 0
        %478 = vmatpush1.bf16.xpose.msra.mxu0 0
        %479 = vmatprep.subr.bf16.mxu0 0
        %480 = vmatpush1.bf16.xpose.msra.mxu0 0
        %481 = vmatprep.subr.bf16.mxu0 0
        %482 = vmatpush1.bf16.xpose.msra.mxu0 0
        %483 = vmatprep.subr.bf16.mxu0 0
        %484 = vmatpush1.bf16.xpose.msra.mxu0 0
        %485 = vmatprep.subr.bf16.mxu0 0
        %486 = vmatpush1.bf16.xpose.msra.mxu0 0
        %487 = vmatprep.subr.bf16.mxu0 0
        %488 = vmatpush1.bf16.xpose.msra.mxu0 0
        %489 = vmatprep.subr.bf16.mxu0 0
        %490 = vmatpush1.bf16.xpose.msra.mxu0 0
        %491 = vmatprep.mubr.bf16.mxu0 0
        %492 = vmatmul.mubr.bf16.gmra.mrb[0].mxu0 %v412
        %v493 = vpop.f32.mrb[0].mxu0
        %v494 = vadd.f32 0.0, %v493
        %v495 = vpop.f32.mrb[0].mxu0
        %v496 = vpop.f32.mrb[0].mxu0
        %v497 = vadd.f32 0.0, %v496
        %v498 = vpop.f32.mrb[0].mxu0
        %499 = vmatprep.mubr.bf16.mxu0 0
        %500 = vmatmul.mubr.bf16.gmra.mrb[0].mxu0 %v415
        %v501 = vpop.f32.mrb[0].mxu0
        %v502 = vadd.f32 0.0, %v501
        %v503 = vpop.f32.mrb[0].mxu0
        %v504 = vpop.f32.mrb[0].mxu0
        %v505 = vadd.f32 0.0, %v504
        %v506 = vpop.f32.mrb[0].mxu0
        %507 = vmatprep.mubr.bf16.mxu0 0
        %508 = vmatmul.mubr.bf16.gmra.mrb[0].mxu0 %v418
        %v509 = vpop.f32.mrb[0].mxu0
        %v510 = vadd.f32 0.0, %v509
        %v511 = vpop.f32.mrb[0].mxu0
        %v512 = vpop.f32.mrb[0].mxu0
        %v513 = vadd.f32 0.0, %v512
        %v514 = vpop.f32.mrb[0].mxu0
        %515 = vmatprep.mubr.bf16.mxu0 0
        %516 = vmatmul.mubr.bf16.gmra.mrb[0].mxu0 %v421
        %v517 = vpop.f32.mrb[0].mxu0
        %v518 = vadd.f32 0.0, %v517
        %v519 = vpop.f32.mrb[0].mxu0
        %v520 = vpop.f32.mrb[0].mxu0
        %v521 = vadd.f32 0.0, %v520
        %v522 = vpop.f32.mrb[0].mxu0
        %523 = vmatprep.mubr.bf16.mxu0 0
        %524 = vmatmul.mubr.bf16.gmra.mrb[0].mxu0 %v424
        %v525 = vpop.f32.mrb[0].mxu0
        %v526 = vadd.f32 0.0, %v525
        %v527 = vpop.f32.mrb[0].mxu0
        %v528 = vpop.f32.mrb[0].mxu0
        %v529 = vadd.f32 0.0, %v528
        %v530 = vpop.f32.mrb[0].mxu0
        %531 = vmatprep.mubr.bf16.mxu0 0
        %532 = vmatmul.mubr.bf16.gmra.mrb[0].mxu0 %v427
        %v533 = vpop.f32.mrb[0].mxu0
        %v534 = vadd.f32 0.0, %v533
        %v535 = vpop.f32.mrb[0].mxu0
        %v536 = vpop.f32.mrb[0].mxu0
        %v537 = vadd.f32 0.0, %v536
        %v538 = vpop.f32.mrb[0].mxu0
        %539 = vmatprep.mubr.bf16.mxu0 0
        %540 = vmatmul.mubr.bf16.gmra.mrb[0].mxu0 %v430
        %v541 = vpop.f32.mrb[0].mxu0
        %v542 = vadd.f32 0.0, %v541
        %v543 = vpop.f32.mrb[0].mxu0
        %v544 = vpop.f32.mrb[0].mxu0
        %v545 = vadd.f32 0.0, %v544
        %v546 = vpop.f32.mrb[0].mxu0
        %547 = vmatprep.mubr.bf16.mxu0 0
        %548 = vmatmul.mubr.bf16.gmra.mrb[0].mxu0 %v433
        %v549 = vpop.f32.mrb[0].mxu0
        %v550 = vadd.f32 0.0, %v549
        %v551 = vpop.f32.mrb[0].mxu0
        %v552 = vpop.f32.mrb[0].mxu0
        %v553 = vadd.f32 0.0, %v552
        %v554 = vpop.f32.mrb[0].mxu0
        %555 = vdwg.mxu0
        %v556 = vld [vmem:[%s291] sm:$0xff]
        %v557 = vld [vmem:[%s291 + $0x8] sm:$0xff]
        %v558 = vld [vmem:[%s291 + $0x10] sm:$0xff]
        %v559 = vld [vmem:[%s291 + $0x18] sm:$0xff]
        %v560 = vld [vmem:[%s291 + $0x20] sm:$0xff]
        %v561 = vld [vmem:[%s291 + $0x28] sm:$0xff]
        %v562 = vld [vmem:[%s291 + $0x30] sm:$0xff]
        %v563 = vld [vmem:[%s291 + $0x38] sm:$0xff]
        %v564 = vld [vmem:[%s291 + $0x40] sm:$0xff]
        %v565 = vld [vmem:[%s291 + $0x48] sm:$0xff]
        %v566 = vld [vmem:[%s291 + $0x50] sm:$0xff]
        %v567 = vld [vmem:[%s291 + $0x58] sm:$0xff]
        %v568 = vld [vmem:[%s291 + $0x60] sm:$0xff]
        %v569 = vld [vmem:[%s291 + $0x68] sm:$0xff]
        %v570 = vld [vmem:[%s291 + $0x70] sm:$0xff]
        %v571 = vld [vmem:[%s291 + $0x78] sm:$0xff]
        %v572 = vld [vmem:[%s295] sm:$0x1]
        %574 = vset.pattern.permute.xlu0 0
        %575 = vperm.xlu0 %574, %v556
        %v576 = vpop.permute.xlu0 %575
        %579 = vset.pattern.permute.xlu0 0
        %580 = vperm.xlu0 %579, %v557
        %v581 = vpop.permute.xlu0 %580
        %584 = vset.pattern.permute.xlu0 0
        %585 = vperm.xlu0 %584, %v558
        %v586 = vpop.permute.xlu0 %585
        %589 = vset.pattern.permute.xlu0 0
        %590 = vperm.xlu0 %589, %v559
        %v591 = vpop.permute.xlu0 %590
        %594 = vset.pattern.permute.xlu0 0
        %595 = vperm.xlu0 %594, %v560
        %v596 = vpop.permute.xlu0 %595
        %599 = vset.pattern.permute.xlu0 0
        %600 = vperm.xlu0 %599, %v561
        %v601 = vpop.permute.xlu0 %600
        %604 = vset.pattern.permute.xlu0 0
        %605 = vperm.xlu0 %604, %v562
        %v606 = vpop.permute.xlu0 %605
        %609 = vset.pattern.permute.xlu0 0
        %610 = vperm.xlu0 %609, %v563
        %v611 = vpop.permute.xlu0 %610
        %614 = vset.pattern.permute.xlu0 0
        %615 = vperm.xlu0 %614, %v564
        %v616 = vpop.permute.xlu0 %615
        %619 = vset.pattern.permute.xlu0 0
        %620 = vperm.xlu0 %619, %v565
        %v621 = vpop.permute.xlu0 %620
        %624 = vset.pattern.permute.xlu0 0
        %625 = vperm.xlu0 %624, %v566
        %v626 = vpop.permute.xlu0 %625
        %629 = vset.pattern.permute.xlu0 0
        %630 = vperm.xlu0 %629, %v567
        %v631 = vpop.permute.xlu0 %630
        %634 = vset.pattern.permute.xlu0 0
        %635 = vperm.xlu0 %634, %v568
        %v636 = vpop.permute.xlu0 %635
        %639 = vset.pattern.permute.xlu0 0
        %640 = vperm.xlu0 %639, %v569
        %v641 = vpop.permute.xlu0 %640
        %644 = vset.pattern.permute.xlu0 0
        %645 = vperm.xlu0 %644, %v570
        %v646 = vpop.permute.xlu0 %645
        %649 = vset.pattern.permute.xlu0 0
        %650 = vperm.xlu0 %649, %v571
        %v651 = vpop.permute.xlu0 %650
        %v654 = vlaneseq
        %v655 = vshrl.u32 %v654, 7
        %v656 = vsub.s32 0, %v655
        %v657 = vrot.slane %v572, %v656
        %v659 = vadd.f32 %v576, %v657
        %v660 = vadd.f32 %v581, %v657
        %v661 = vadd.f32 %v586, %v657
        %v662 = vadd.f32 %v591, %v657
        %v663 = vadd.f32 %v596, %v657
        %v664 = vadd.f32 %v601, %v657
        %v665 = vadd.f32 %v606, %v657
        %v666 = vadd.f32 %v611, %v657
        %v667 = vadd.f32 %v616, %v657
        %v668 = vadd.f32 %v621, %v657
        %v669 = vadd.f32 %v626, %v657
        %v670 = vadd.f32 %v631, %v657
        %v671 = vadd.f32 %v636, %v657
        %v672 = vadd.f32 %v641, %v657
        %v673 = vadd.f32 %v646, %v657
        %v674 = vadd.f32 %v651, %v657
        %v675 = vmul.f32 %v494, 2.0
        %v676 = vmul.f32 %v497, 2.0
        %v677 = vmul.f32 %v502, 2.0
        %v678 = vmul.f32 %v505, 2.0
        %v679 = vmul.f32 %v510, 2.0
        %v680 = vmul.f32 %v513, 2.0
        %v681 = vmul.f32 %v518, 2.0
        %v682 = vmul.f32 %v521, 2.0
        %v683 = vmul.f32 %v526, 2.0
        %v684 = vmul.f32 %v529, 2.0
        %v685 = vmul.f32 %v534, 2.0
        %v686 = vmul.f32 %v537, 2.0
        %v687 = vmul.f32 %v542, 2.0
        %v688 = vmul.f32 %v545, 2.0
        %v689 = vmul.f32 %v550, 2.0
        %v690 = vmul.f32 %v553, 2.0
        %v691 = vsub.f32 %v659, %v675
        %v692 = vsub.f32 %v660, %v676
        %v693 = vsub.f32 %v661, %v677
        %v694 = vsub.f32 %v662, %v678
        %v695 = vsub.f32 %v663, %v679
        %v696 = vsub.f32 %v664, %v680
        %v697 = vsub.f32 %v665, %v681
        %v698 = vsub.f32 %v666, %v682
        %v699 = vsub.f32 %v667, %v683
        %v700 = vsub.f32 %v668, %v684
        %v701 = vsub.f32 %v669, %v685
        %v702 = vsub.f32 %v670, %v686
        %v703 = vsub.f32 %v671, %v687
        %v704 = vsub.f32 %v672, %v688
        %v705 = vsub.f32 %v673, %v689
        %v706 = vsub.f32 %v674, %v690
        %v707 = vmax.f32 %v691, 0.0
        %v708 = vmax.f32 %v692, 0.0
        %v709 = vmax.f32 %v693, 0.0
        %v710 = vmax.f32 %v694, 0.0
        %v711 = vmax.f32 %v695, 0.0
        %v712 = vmax.f32 %v696, 0.0
        %v713 = vmax.f32 %v697, 0.0
        %v714 = vmax.f32 %v698, 0.0
        %v715 = vmax.f32 %v699, 0.0
        %v716 = vmax.f32 %v700, 0.0
        %v717 = vmax.f32 %v701, 0.0
        %v718 = vmax.f32 %v702, 0.0
        %v719 = vmax.f32 %v703, 0.0
        %v720 = vmax.f32 %v704, 0.0
        %v721 = vmax.f32 %v705, 0.0
        %v722 = vmax.f32 %v706, 0.0
        %v723 = vpack.c.bf16 %v708, %v707
        %v724 = vpack.c.bf16 %v710, %v709
        %v725 = vpack.c.bf16 %v712, %v711
        %v726 = vpack.c.bf16 %v714, %v713
        %v727 = vpack.c.bf16 %v716, %v715
        %v728 = vpack.c.bf16 %v718, %v717
        %v729 = vpack.c.bf16 %v720, %v719
        %v730 = vpack.c.bf16 %v722, %v721
        %v739 = vunpack.c.l.b16 %v723
        %v740 = vunpack.c.h.b16 %v723
        %v741 = vunpack.c.l.b16 %v724
        %v742 = vunpack.c.h.b16 %v724
        %v743 = vunpack.c.l.b16 %v725
        %v744 = vunpack.c.h.b16 %v725
        %v745 = vunpack.c.l.b16 %v726
        %v746 = vunpack.c.h.b16 %v726
        %v747 = vunpack.c.l.b16 %v727
        %v748 = vunpack.c.h.b16 %v727
        %v749 = vunpack.c.l.b16 %v728
        %v750 = vunpack.c.h.b16 %v728
        %v751 = vunpack.c.l.b16 %v729
        %v752 = vunpack.c.h.b16 %v729
        %v753 = vunpack.c.l.b16 %v730
        %v754 = vunpack.c.h.b16 %v730
        %v755 = vpack.c.b16 %v739, %v739
        %v756 = vpack.c.b16 %v740, %v740
        %v757 = vpack.c.b16 %v741, %v741
        %v758 = vpack.c.b16 %v742, %v742
        %v759 = vpack.c.b16 %v743, %v743
        %v760 = vpack.c.b16 %v744, %v744
        %v761 = vpack.c.b16 %v745, %v745
        %v762 = vpack.c.b16 %v746, %v746
        %v763 = vpack.c.b16 %v747, %v747
        %v764 = vpack.c.b16 %v748, %v748
        %v765 = vpack.c.b16 %v749, %v749
        %v766 = vpack.c.b16 %v750, %v750
        %v767 = vpack.c.b16 %v751, %v751
        %v768 = vpack.c.b16 %v752, %v752
        %v769 = vpack.c.b16 %v753, %v753
        %v770 = vpack.c.b16 %v754, %v754
        %787 = vst [vmem:[%s267] sm:$0xf] %v755
        %788 = vst [vmem:[%s267 + $0x4] sm:$0xf] %v756
        %789 = vst [vmem:[%s267 + $0x8] sm:$0xf] %v757
        %790 = vst [vmem:[%s267 + $0xc] sm:$0xf] %v758
        %791 = vst [vmem:[%s267 + $0x10] sm:$0xf] %v759
        %792 = vst [vmem:[%s267 + $0x14] sm:$0xf] %v760
        %793 = vst [vmem:[%s267 + $0x18] sm:$0xf] %v761
        %794 = vst [vmem:[%s267 + $0x1c] sm:$0xf] %v762
        %795 = vst [vmem:[%s267 + $0x20] sm:$0xf] %v763
        %796 = vst [vmem:[%s267 + $0x24] sm:$0xf] %v764
        %797 = vst [vmem:[%s267 + $0x28] sm:$0xf] %v765
        %798 = vst [vmem:[%s267 + $0x2c] sm:$0xf] %v766
        %799 = vst [vmem:[%s267 + $0x30] sm:$0xf] %v767
        %800 = vst [vmem:[%s267 + $0x34] sm:$0xf] %v768
        %801 = vst [vmem:[%s267 + $0x38] sm:$0xf] %v769
        %802 = vst [vmem:[%s267 + $0x3c] sm:$0xf] %v770
        %s803 = sand.u32 %s148, 1
        %s804 = scalar_lea.sflag [#allocation3], %s803
        %s805 = sand.u32 %s148, 1
        %s806 = smul.addr %s805, 64
        %s807 = scalar_lea.vmem [#allocation2], %s806
        // Predicated region
        $region37: #{tpu_custom_call.1} parent=35 // pred_check
          %p808 = pneg %p158
        $region38: #{tpu_custom_call.1} parent=35 // pred_check_branch
          %810 = sbr.rel (%p808) target = $region40
        $region39: #{tpu_custom_call.1} parent=35 // pred_region
          %s811 = smul.u32 16, %s23
          %s813 = ssub.s32 1024, 1024
          %814 = vsyncadd %s804, %s813
          %s815 = smul.addr %s22, 16
          %s816 = sadd.s32 %s811, %s815
          %s817 = smul.addr %s816, 64
          %s818 = scalar_lea.hbm %s4, %s817
          %s819 = sshll.u32 %s807, 4
          %s820 = int_to_ptr.vmem [resolvable:$true] %s819
          %825 = dma.vmem_to_hbm [thread:$0]  %s820, 1024, %s818, %s804, 64, 64, 4
        $region40: #{tpu_custom_call.1} parent=35 // pred_fallthru
          _
      $region36: #{tpu_custom_call.1} parent=5 // pred_fallthru
        _
      %p826 = scmp.le.s32.totalorder 2, %s13
      // Predicated region
      $region41: #{tpu_custom_call.1} parent=5 // pred_check
        %p827 = pneg %p826
      $region42: #{tpu_custom_call.1} parent=5 // pred_check_branch
        %829 = sbr.rel (%p827) target = $region44
      $region43: #{tpu_custom_call.1} parent=5 // pred_region
        %s830 = ssub.s32 %s13, 2
        // Predicated region
        $region45: #{tpu_custom_call.1} parent=43 // pred_check
          %p831 = pneg %p164
        $region46: #{tpu_custom_call.1} parent=43 // pred_check_branch
          %833 = sbr.rel (%p831) target = $region48
        $region47: #{tpu_custom_call.1} parent=43 // pred_region
          %s834 = sand.u32 %s149, 1
          %s835 = scalar_lea.sflag [#allocation3], %s834
          %s836 = sand.u32 %s149, 1
          %s837 = smul.addr %s836, 64
          %s838 = scalar_lea.vmem [#allocation2], %s837
          %839 = dma.done %s835, 1024
        $region48: #{tpu_custom_call.1} parent=43 // pred_fallthru
          _
      $region44: #{tpu_custom_call.1} parent=5 // pred_fallthru
        _
    $region6: #{tpu_custom_call.1} parent=1 // loop_footer
      %s17 = sadd.s32 1, %s13
    $region7: #{tpu_custom_call.1} parent=1 // loop_footer_branch
      %12 = sbr.rel target = $region3
    $region8: #{tpu_custom_call.1} parent=1 // loop_exit
      _
    %840 = vsyncpa [#allocation3], 1
    %s841 = scalar_lea.sflag [#allocation3], 1
    %842 = vsyncpa %s841, 1

</llo_original>
